<compile_context>
chip_gen: v7x
topology: tpu7x:2x2x1
jax: 0.10.0
libtpu: 0.0.40
codegen_flags: <defaults>
</compile_context>

<pallas_src>
import jax
import jax.numpy as jnp
from jax.experimental import pallas as pl
from jax.experimental.pallas import tpu as pltpu


def _mlp_kernel(x_ref, w_ref, b_ref, o_ref):
    # x_ref: (TF, Cin)  feature-row tile
    # w_ref: (Cin, Cout_pad)  Linear weight (transposed), resident across tiles
    # b_ref: (1, Cout_pad)    Linear bias
    # o_ref: (TF, Cout_pad)   ReLU(x @ W + b)
    t = jnp.dot(x_ref[...], w_ref[...], preferred_element_type=jnp.float32)
    o_ref[...] = jnp.maximum(t + b_ref[...], 0.0).astype(o_ref.dtype)


def _masked_max_kernel(g_ref, m_ref, o_ref):
    # g_ref: (K, TN, Cout_pad)  gathered transformed neighbor features
    # m_ref: (K, TN, 1)         validity mask (1.0 valid / 0.0 padding)
    # o_ref: (TN, Cout_pad)     max-pooled aggregate per node
    t = g_ref[...] * m_ref[...]          # padded slots -> 0 (safe: ReLU >= 0)
    o_ref[...] = jnp.max(t, axis=0).astype(o_ref.dtype)   # leading-dim reduce


def _round_up(x, m):
    return pl.cdiv(x, m) * m


def max_pool_aggregate(features, neighbor_idx, neighbor_mask, W, b,
                       *, tile_f=128, tile_n=128):
    """Pallas implementation of MaxPoolingAggregator.forward."""
    F, Cin = features.shape
    N, K = neighbor_idx.shape
    Cout = W.shape[1]

    # Lane-dense output channels (multiple of 128 -> unmasked vst).
    cout_pad = _round_up(Cout, 128)
    if cout_pad != Cout:
        W = jnp.pad(W, ((0, 0), (0, cout_pad - Cout)))
        b = jnp.pad(b, ((0, cout_pad - Cout),))
    W = W.astype(jnp.float32)
    b2 = b.reshape(1, cout_pad).astype(jnp.float32)

    # ---- Stage 1: transform each unique feature row once ----
    tile_f = min(tile_f, _round_up(F, 8))
    f_pad = _round_up(F, tile_f)
    feats = features.astype(jnp.float32)
    if f_pad != F:
        feats = jnp.pad(feats, ((0, f_pad - F), (0, 0)))

    transformed = pl.pallas_call(
        _mlp_kernel,
        out_shape=jax.ShapeDtypeStruct((f_pad, cout_pad), jnp.float32),
        grid_spec=pltpu.PrefetchScalarGridSpec(
            num_scalar_prefetch=0,
            grid=(f_pad // tile_f,),
            in_specs=[
                pl.BlockSpec((tile_f, Cin), lambda i: (i, 0)),
                # constant index_map -> weight/bias DMA'd once, stay resident
                pl.BlockSpec((Cin, cout_pad), lambda i: (0, 0)),
                pl.BlockSpec((1, cout_pad), lambda i: (0, 0)),
            ],
            out_specs=pl.BlockSpec((tile_f, cout_pad), lambda i: (i, 0)),
        ),
        compiler_params=pltpu.CompilerParams(
            dimension_semantics=("parallel",)),
    )(feats, W, b2)

    # ---- Glue: data-dependent row gather of transformed features ----
    # Padded nodes / slots point at row 0 and are zeroed by the mask in-kernel.
    # TODO(synk): for very large graphs, replace this wrapper-side gather with
    # scalar-prefetched neighbor_idx in SMEM + manual row DMAs (memory_space=
    # pl.ANY) or an in-kernel jnp.take on a VMEM-resident transformed block to
    # avoid materializing the (K, N, Cout) copy in HBM.
    tile_n = min(tile_n, _round_up(N, 8))
    n_pad = _round_up(N, tile_n)
    if n_pad != N:
        neighbor_idx = jnp.pad(neighbor_idx, ((0, n_pad - N), (0, 0)))
        neighbor_mask = jnp.pad(neighbor_mask, ((0, n_pad - N), (0, 0)))
    safe_idx = jnp.where(neighbor_mask > 0, neighbor_idx, 0).astype(jnp.int32)
    gathered = transformed[safe_idx.T]                         # (K, n_pad, Cout_pad)
    mask3 = neighbor_mask.T[:, :, None].astype(jnp.float32)    # (K, n_pad, 1)

    # ---- Stage 2: masked max over neighbor slots ----
    out = pl.pallas_call(
        _masked_max_kernel,
        out_shape=jax.ShapeDtypeStruct((n_pad, cout_pad), jnp.float32),
        grid_spec=pltpu.PrefetchScalarGridSpec(
            num_scalar_prefetch=0,
            grid=(n_pad // tile_n,),
            in_specs=[
                pl.BlockSpec((K, tile_n, cout_pad), lambda i: (0, i, 0)),
                pl.BlockSpec((K, tile_n, 1), lambda i: (0, i, 0)),
            ],
            out_specs=pl.BlockSpec((tile_n, cout_pad), lambda i: (i, 0)),
        ),
        compiler_params=pltpu.CompilerParams(
            dimension_semantics=("parallel",)),
    )(gathered, mask3)

    return out[:N, :Cout]


def _reference(features, neighbor_idx, neighbor_mask, W, b):
    """Pure-JAX reference mirroring the PyTorch module semantics."""
    safe_idx = jnp.where(neighbor_mask > 0, neighbor_idx, 0)
    g = features[safe_idx]                                # (N, K, Cin)
    t = jax.nn.relu(g @ W + b)                            # (N, K, Cout)
    t = t * neighbor_mask[..., None]                      # drop padded slots
    agg = t.max(axis=1)                                   # (N, Cout)
    cnt = neighbor_mask.sum(axis=1, keepdims=True)
    return jnp.where(cnt > 0.0, agg, 0.0)                 # empty -> zero vector


if __name__ == "__main__":
    # small deterministic problem
    N, K = 16, 8          # nodes, max neighbors per node
    F = 32                # number of feature rows
    Cin, Cout = 32, 64    # in_channels / out_channels of the aggregator

    key = jax.random.PRNGKey(0)
    k1, k2, k3, k4, k5 = jax.random.split(key, 5)

    features = jax.random.normal(k1, (F, Cin), dtype=jnp.float32)
    neighbor_idx = jax.random.randint(k2, (N, K), 0, F, dtype=jnp.int32)
    counts = jax.random.randint(k3, (N,), 0, K + 1)
    counts = counts.at[0].set(0)   # node 0: no neighbors -> zero output row
    counts = counts.at[1].set(K)   # node 1: full neighborhood
    neighbor_mask = (jnp.arange(K)[None, :] < counts[:, None]).astype(jnp.float32)

    # deterministic synthetic parameters (nn.Linear weight^T and bias)
    W = 0.1 * jax.random.normal(k4, (Cin, Cout), dtype=jnp.float32)
    b = 0.1 * jax.random.normal(k5, (Cout,), dtype=jnp.float32)

    out = max_pool_aggregate(features, neighbor_idx, neighbor_mask, W, b)
    out = jax.block_until_ready(out)

    ref = _reference(features, neighbor_idx, neighbor_mask, W, b)
    assert out.shape == (N, Cout)
    assert jnp.allclose(out, ref, atol=1e-4, rtol=1e-4), "mismatch vs reference"

    print("KERNEL_OK")
</pallas_src>

<mosaic_0001>
module attributes {stable_mosaic.version = 11 : i64} {
  func.func @_mlp_kernel(%arg0: i32, %arg1: memref<32x32xf32, #tpu.memory_space<vmem>>, %arg2: memref<32x128xf32, #tpu.memory_space<vmem>>, %arg3: memref<1x128xf32, #tpu.memory_space<vmem>>, %arg4: memref<32x128xf32, #tpu.memory_space<vmem>>) attributes {dimension_semantics = [#tpu.dimension_semantics<parallel>], iteration_bounds = array<i64: 1>, scalar_prefetch = 0 : i64, scratch_operands = 0 : i64, tpu.core_type = #tpu.core_type<tc>, window_params = [{transform_indices = @transform_0, window_bounds = array<i64: 32, 32>}, {pipeline_mode = #tpu.pipeline_mode<synchronous>, transform_indices = @transform_1, window_bounds = array<i64: 32, 128>}, {pipeline_mode = #tpu.pipeline_mode<synchronous>, transform_indices = @transform_2, window_bounds = array<i64: 1, 128>}, {transform_indices = @transform_3, window_bounds = array<i64: 32, 128>}]} {
    %c0 = arith.constant 0 : index
    %c0_0 = arith.constant 0 : index
    %0 = vector.load %arg1[%c0, %c0_0] : memref<32x32xf32, #tpu.memory_space<vmem>>, vector<32x32xf32>
    %c0_1 = arith.constant 0 : index
    %c0_2 = arith.constant 0 : index
    %1 = vector.load %arg2[%c0_1, %c0_2] : memref<32x128xf32, #tpu.memory_space<vmem>>, vector<32x128xf32>
    %cst = arith.constant dense<0.000000e+00> : vector<32x128xf32>
    %2 = tpu.matmul %0, %1, %cst {dimension_numbers = #tpu.dot_dimension_numbers<[1], [0], [0], [1], [0, 0, 1, 1], [], []>} : vector<32x32xf32>, vector<32x128xf32>, vector<32x128xf32> -> vector<32x128xf32>
    %c0_3 = arith.constant 0 : index
    %c0_4 = arith.constant 0 : index
    %3 = vector.load %arg3[%c0_3, %c0_4] : memref<1x128xf32, #tpu.memory_space<vmem>>, vector<1x128xf32>
    %4 = vector.broadcast %3 : vector<1x128xf32> to vector<32x128xf32>
    %5 = arith.addf %2, %4 : vector<32x128xf32>
    %cst_5 = arith.constant 0.000000e+00 : f32
    %6 = vector.broadcast %cst_5 : f32 to vector<32x128xf32>
    %7 = arith.maximumf %5, %6 : vector<32x128xf32>
    %c0_6 = arith.constant 0 : index
    %c0_7 = arith.constant 0 : index
    %8 = vector.load %arg4[%c0_6, %c0_7] : memref<32x128xf32, #tpu.memory_space<vmem>>, vector<32x128xf32>
    tpu.vector_store %arg4[%c0_6, %c0_7], %7 {strides = array<i32>} : memref<32x128xf32, #tpu.memory_space<vmem>>, vector<32x128xf32>,
    return
  }
  func.func @transform_0(%arg0: i32) -> (i32, i32) {
    %c0_i32 = arith.constant 0 : i32
    %c0_i32_0 = arith.constant 0 : i32
    return %arg0, %c0_i32 : i32, i32
  }
  func.func @transform_1(%arg0: i32) -> (i32, i32) {
    %c0_i32 = arith.constant 0 : i32
    %c0_i32_0 = arith.constant 0 : i32
    %c0_i32_1 = arith.constant 0 : i32
    return %c0_i32, %c0_i32_0 : i32, i32
  }
  func.func @transform_2(%arg0: i32) -> (i32, i32) {
    %c0_i32 = arith.constant 0 : i32
    %c0_i32_0 = arith.constant 0 : i32
    %c0_i32_1 = arith.constant 0 : i32
    return %c0_i32, %c0_i32_0 : i32, i32
  }
  func.func @transform_3(%arg0: i32) -> (i32, i32) {
    %c0_i32 = arith.constant 0 : i32
    %c0_i32_0 = arith.constant 0 : i32
    return %arg0, %c0_i32 : i32, i32
  }
}

</mosaic_0001>

<llo_original>
// kernel: tpu_custom_call.1
$region0: #{tpu_custom_call.1}
  #allocation0 [shape = 'u32[]', space=smem, size = 0x4, offset = 0x4, fixed_abs, tag = 'smem constant byte address 0x4 - core index']
  #allocation1 [shape = 'u32[144,128]{1,0:T(1,128)}', space=vmem, size = 0x12000, scoped, tag = 'internal scratch']
  %s0 = inlined_call_operand.hbm [shape: f32[32,32], index: 0, kind: input, shape index: {}]
  %s1 = inlined_call_operand.hbm [shape: f32[32,128], index: 1, kind: input, shape index: {}]
  %s2 = inlined_call_operand.vmem [shape: f32[1,128], index: 2, kind: input, shape index: {}]
  %s3 = inlined_call_operand.hbm [shape: f32[32,128], index: 3, kind: output, shape index: {}]
  %s4 = sld [smem:[#allocation0]]
  $region30: #{tpu_custom_call.1} parent=0
    _
  %s6 = ssub.s32 1, %s4
  %s7 = scalar_select 0, %s6, %s4
  $region1: #{tpu_custom_call.1} parent=0
    #allocation2 [shape = 'u8[16384]{0}', space=vmem, size = 0x4000, scoped, tag = 'input window, operand 0, single buffered']
    #allocation3 [shape = 's32[1]{0}', space=sflag, size = 0x4, scoped, tag = 'scoped memory for tpu_custom_call.1']
    #allocation4 [shape = 's32[1]{0}', space=sflag, size = 0x4, scoped, tag = 'scoped memory for tpu_custom_call.1']
    #allocation5 [shape = 'u8[16384]{0}', space=vmem, size = 0x4000, scoped, tag = 'input window, operand 1, single buffered']
    #allocation6 [shape = 's32[1]{0}', space=sflag, size = 0x4, scoped, tag = 'scoped memory for tpu_custom_call.1']
    #allocation7 [shape = 'u8[16384]{0}', space=vmem, size = 0x4000, scoped, tag = 'output window, operand 0, single buffered']
    %8 = vsyncpa [#allocation3], 0
    %9 = vsyncpa [#allocation6], 0
    %10 = vsyncpa [#allocation4], 0
    // Predicated region
    $region2: #{tpu_custom_call.1} parent=1 // pred_check
      _
    $region3: #{tpu_custom_call.1} parent=1 // pred_check_branch
      %12 = sbr.rel (0) target = $region5
    $region4: #{tpu_custom_call.1} parent=1 // pred_region
      %s14 = ssub.s32 512, 512
      %15 = vsyncadd [#allocation3], %s14
      %s16 = sshll.u32 [#allocation2], 4
      %s17 = int_to_ptr.vmem [resolvable:$true] %s16
      %22 = dma.hbm_to_vmem [thread:$0]  %s0, 512, %s17, [#allocation3], 128, 128, 8
    $region5: #{tpu_custom_call.1} parent=1 // pred_fallthru
      _
    // Predicated region
    $region6: #{tpu_custom_call.1} parent=1 // pred_check
      _
    $region7: #{tpu_custom_call.1} parent=1 // pred_check_branch
      %24 = sbr.rel (0) target = $region9
    $region8: #{tpu_custom_call.1} parent=1 // pred_region
      %s26 = ssub.s32 512, 512
      %27 = vsyncadd [#allocation6], %s26
      %s28 = sshll.u32 [#allocation5], 4
      %s29 = int_to_ptr.vmem [resolvable:$true] %s28
      %34 = dma.hbm_to_vmem [thread:$0]  %s1, 512, %s29, [#allocation6], 128, 128, 8
    $region9: #{tpu_custom_call.1} parent=1 // pred_fallthru
      _
    // Predicated region
    $region10: #{tpu_custom_call.1} parent=1 // pred_check
      _
    $region11: #{tpu_custom_call.1} parent=1 // pred_check_branch
      %36 = sbr.rel (0) target = $region13
    $region12: #{tpu_custom_call.1} parent=1 // pred_region
      _
    $region13: #{tpu_custom_call.1} parent=1 // pred_fallthru
      _
    // Predicated region
    $region14: #{tpu_custom_call.1} parent=1 // pred_check
      _
    $region15: #{tpu_custom_call.1} parent=1 // pred_check_branch
      %38 = sbr.rel (0) target = $region17
    $region16: #{tpu_custom_call.1} parent=1 // pred_region
      %39 = dma.done [#allocation3], 512
    $region17: #{tpu_custom_call.1} parent=1 // pred_fallthru
      _
    // Predicated region
    $region18: #{tpu_custom_call.1} parent=1 // pred_check
      _
    $region19: #{tpu_custom_call.1} parent=1 // pred_check_branch
      %41 = sbr.rel (0) target = $region21
    $region20: #{tpu_custom_call.1} parent=1 // pred_region
      %42 = dma.done [#allocation6], 512
    $region21: #{tpu_custom_call.1} parent=1 // pred_fallthru
      _
    %v43 = vld [vmem:[#allocation2] sm:$0xff]
    %v44 = vld [vmem:[#allocation2 + $0x8] sm:$0xff]
    %v45 = vld [vmem:[#allocation2 + $0x10] sm:$0xff]
    %v46 = vld [vmem:[#allocation2 + $0x18] sm:$0xff]
    %v47 = vld [vmem:[#allocation5] sm:$0xff]
    %v48 = vld [vmem:[#allocation5 + $0x8] sm:$0xff]
    %v49 = vld [vmem:[#allocation5 + $0x10] sm:$0xff]
    %v50 = vld [vmem:[#allocation5 + $0x18] sm:$0xff]
    %v51 = vld [vmem:[%s2] sm:$0x1]
    %v53 = vlaneseq
    %v54 = vshrl.u32 %v53, 7
    %v55 = vsub.s32 0, %v54
    %v56 = vrot.slane %v51, %v55
    %vm58 = vcmask 261120
    %v60 = vsel %vm58, %v43, 0
    %v63 = vsel %vm58, %v44, 0
    %v66 = vsel %vm58, %v45, 0
    %v69 = vsel %vm58, %v46, 0
    %71 = vmatprep.subr.mxu0 0.0
    %72 = vmatpush1.msra.mxu0 %v47
    %73 = vmatprep.subr.mxu0 0.0
    %74 = vmatpush1.msra.mxu0 %v48
    %75 = vmatprep.subr.mxu0 0.0
    %76 = vmatpush1.msra.mxu0 %v49
    %77 = vmatprep.subr.mxu0 0.0
    %78 = vmatpush1.msra.mxu0 %v50
    %79 = vmatprep.subr.mxu0 0.0
    %80 = vmatpush1.msra.mxu0 0.0
    %81 = vmatprep.subr.mxu0 0.0
    %82 = vmatpush1.msra.mxu0 0.0
    %83 = vmatprep.subr.mxu0 0.0
    %84 = vmatpush1.msra.mxu0 0.0
    %85 = vmatprep.subr.mxu0 0.0
    %86 = vmatpush1.msra.mxu0 0.0
    %87 = vmatprep.subr.mxu0 0.0
    %88 = vmatpush1.msra.mxu0 0.0
    %89 = vmatprep.subr.mxu0 0.0
    %90 = vmatpush1.msra.mxu0 0.0
    %91 = vmatprep.subr.mxu0 0.0
    %92 = vmatpush1.msra.mxu0 0.0
    %93 = vmatprep.subr.mxu0 0.0
    %94 = vmatpush1.msra.mxu0 0.0
    %95 = vmatprep.subr.mxu0 0.0
    %96 = vmatpush1.msra.mxu0 0.0
    %97 = vmatprep.subr.mxu0 0.0
    %98 = vmatpush1.msra.mxu0 0.0
    %99 = vmatprep.subr.mxu0 0.0
    %100 = vmatpush1.msra.mxu0 0.0
    %101 = vmatprep.subr.mxu0 0.0
    %102 = vmatpush1.msra.mxu0 0.0
    %103 = vmatprep.subr.mxu0 0.0
    %104 = vmatpush1.msra.mxu0 0.0
    %105 = vmatprep.subr.mxu0 0.0
    %106 = vmatpush1.msra.mxu0 0.0
    %107 = vmatprep.subr.mxu0 0.0
    %108 = vmatpush1.msra.mxu0 0.0
    %109 = vmatprep.subr.mxu0 0.0
    %110 = vmatpush1.msra.mxu0 0.0
    %111 = vmatprep.subr.mxu0 0.0
    %112 = vmatpush1.msra.mxu0 0.0
    %113 = vmatprep.subr.mxu0 0.0
    %114 = vmatpush1.msra.mxu0 0.0
    %115 = vmatprep.subr.mxu0 0.0
    %116 = vmatpush1.msra.mxu0 0.0
    %117 = vmatprep.subr.mxu0 0.0
    %118 = vmatpush1.msra.mxu0 0.0
    %119 = vmatprep.subr.mxu0 0.0
    %120 = vmatpush1.msra.mxu0 0.0
    %121 = vmatprep.subr.mxu0 0.0
    %122 = vmatpush1.msra.mxu0 0.0
    %123 = vmatprep.subr.mxu0 0.0
    %124 = vmatpush1.msra.mxu0 0.0
    %125 = vmatprep.subr.mxu0 0.0
    %126 = vmatpush1.msra.mxu0 0.0
    %127 = vmatprep.subr.mxu0 0.0
    %128 = vmatpush1.msra.mxu0 0.0
    %129 = vmatprep.subr.mxu0 0.0
    %130 = vmatpush1.msra.mxu0 0.0
    %131 = vmatprep.subr.mxu0 0.0
    %132 = vmatpush1.msra.mxu0 0.0
    %133 = vmatprep.subr.mxu0 0.0
    %134 = vmatpush1.msra.mxu0 0.0
    %135 = vmatprep.mubr.f32.mxu0 0.0
    %136 = vmatmul.mubr.f32.gmra.mrb[0].mxu0 %v60
    %v137 = vpop.f32.mrb[0].mxu0
    %v138 = vadd.f32 %v56, %v137
    %v139 = vpop.f32.mrb[0].mxu0
    %140 = vmatprep.mubr.f32.mxu0 0.0
    %141 = vmatmul.mubr.f32.gmra.mrb[0].mxu0 %v63
    %v142 = vpop.f32.mrb[0].mxu0
    %v143 = vadd.f32 %v56, %v142
    %v144 = vpop.f32.mrb[0].mxu0
    %145 = vmatprep.mubr.f32.mxu0 0.0
    %146 = vmatmul.mubr.f32.gmra.mrb[0].mxu0 %v66
    %v147 = vpop.f32.mrb[0].mxu0
    %v148 = vadd.f32 %v56, %v147
    %v149 = vpop.f32.mrb[0].mxu0
    %150 = vmatprep.mubr.f32.mxu0 0.0
    %151 = vmatmul.mubr.f32.gmra.mrb[0].mxu0 %v69
    %v152 = vpop.f32.mrb[0].mxu0
    %v153 = vadd.f32 %v56, %v152
    %v154 = vpop.f32.mrb[0].mxu0
    %155 = vdwg.mxu0
    %v156 = vmax.f32 %v138, 0.0
    %v157 = vmax.f32 %v143, 0.0
    %v158 = vmax.f32 %v148, 0.0
    %v159 = vmax.f32 %v153, 0.0
    %160 = vst [vmem:[#allocation7] sm:$0xff] %v156
    %161 = vst [vmem:[#allocation7 + $0x8] sm:$0xff] %v157
    %162 = vst [vmem:[#allocation7 + $0x10] sm:$0xff] %v158
    %163 = vst [vmem:[#allocation7 + $0x18] sm:$0xff] %v159
    // Predicated region
    $region22: #{tpu_custom_call.1} parent=1 // pred_check
      _
    $region23: #{tpu_custom_call.1} parent=1 // pred_check_branch
      %165 = sbr.rel (0) target = $region25
    $region24: #{tpu_custom_call.1} parent=1 // pred_region
      %s167 = ssub.s32 512, 512
      %168 = vsyncadd [#allocation4], %s167
      %s169 = sshll.u32 [#allocation7], 4
      %s170 = int_to_ptr.vmem [resolvable:$true] %s169
      %175 = dma.vmem_to_hbm [thread:$0]  %s170, 512, %s3, [#allocation4], 128, 128, 8
    $region25: #{tpu_custom_call.1} parent=1 // pred_fallthru
      _
    // Predicated region
    $region26: #{tpu_custom_call.1} parent=1 // pred_check
      _
    $region27: #{tpu_custom_call.1} parent=1 // pred_check_branch
      %177 = sbr.rel (0) target = $region29
    $region28: #{tpu_custom_call.1} parent=1 // pred_region
      %178 = dma.done [#allocation4], 512
    $region29: #{tpu_custom_call.1} parent=1 // pred_fallthru
      _
    %179 = vsyncpa [#allocation3], 1
    %180 = vsyncpa [#allocation6], 1
    %181 = vsyncpa [#allocation4], 1

</llo_original>
